<compile_context>
chip_gen: v5e
topology: v5e:2x2
jax: 0.10.0
libtpu: 0.0.40
codegen_flags: <defaults>
</compile_context>

<pallas_src>
import functools

import jax
import jax.numpy as jnp
from jax.experimental import pallas as pl
from jax.experimental.pallas import tpu as pltpu


def _round_up(x: int, m: int) -> int:
    return ((x + m - 1) // m) * m


def _vmem_capacity_bytes() -> int:
    try:
        return int(pltpu.get_tpu_info().vmem_capacity_bytes)
    except Exception:
        return 64 << 20  # conservative (v7x-sized) fallback, also hit on CPU


def _mlp_kernel(x_ref, w1_ref, b1_ref, w2_ref, b2_ref, *rest,
                dropout_thresh: int, inv_keep: float, training: bool):
    if training:
        bits_ref, o_ref, acc_ref = rest
    else:
        o_ref, acc_ref = rest

    j = pl.program_id(1)

    # Initialize the f32 accumulator with the output bias at the first H tile.
    @pl.when(j == 0)
    def _init():
        acc_ref[...] = jnp.broadcast_to(b2_ref[...], acc_ref.shape)

    # ---- Linear 1 (MXU, f32 accumulation) + bias + ReLU (VPU) ----
    h = jnp.dot(x_ref[...], w1_ref[...], preferred_element_type=jnp.float32)
    h = jnp.maximum(h + b1_ref[...], 0.0)          # b1 is (1, TH) -> broadcasts
    h = h.astype(x_ref.dtype)                      # bf16 io: halve live temp

    # ---- Dropout (training only): uint32 threshold compare + select ----
    if training and dropout_thresh > 0:
        keep = bits_ref[...] >= jnp.uint32(dropout_thresh)   # P(keep) = 1 - p
        h = jnp.where(keep, h * inv_keep, 0.0)

    # ---- Linear 2 partial product, accumulated over H tiles ----
    acc_ref[...] += jnp.dot(h, w2_ref[...], preferred_element_type=jnp.float32)

    @pl.when(j == pl.num_programs(1) - 1)
    def _finalize():
        o_ref[...] = acc_ref[...].astype(o_ref.dtype)


def mlp_forward(x, w1, b1, w2, b2, *, dropout_p=0.2, training=False, seed=0):
    """x: [B, in_dim]; w1: [in_dim, hidden]; w2: [hidden, out_dim].

    (PyTorch nn.Linear stores W as [out, in]; pre-transpose before calling.)
    Matmuls run in x.dtype with f32 accumulation, so bf16 callers get the
    full-rate MXU path; the demo below uses f32 for an exact reference check.
    """
    B, in_dim = x.shape
    hidden = w1.shape[1]
    out_dim = w2.shape[1]
    dt = x.dtype
    itemsize = jnp.dtype(dt).itemsize
    sub = {4: 8, 2: 16, 1: 32}.get(itemsize, 8)      # sublane multiple

    training = bool(training) and float(dropout_p) > 0.0

    # Lane-pad feature dims (zero padding is a mathematical no-op here).
    K = _round_up(in_dim, 128)
    N = _round_up(out_dim, 128)
    H_full = _round_up(hidden, 128)

    # --- per-generation VMEM budget ---
    vmem_cap = _vmem_capacity_bytes()
    gate = int(vmem_cap * 0.42)                      # live-buffer budget/step
    tb_cap = 1024 if vmem_cap >= (96 << 20) else 512
    tb_start = max(sub, min(tb_cap, int(pl.next_power_of_2(max(B, 1)))))
    tb_floor = min(256, tb_start)

    def step_bytes(tb, th, n_htiles):
        w_buf = 1 if n_htiles == 1 else 2            # resident weights: 1 buf
        w = w_buf * ((K * th + th * N) * itemsize + (th + N) * 4)
        io = 2 * tb * (K + N) * itemsize             # double-buffered x / out
        tmp = tb * th * 4 + tb * th * itemsize + tb * N * 4  # h_f32, h_cast, acc
        if training:
            tmp += 2 * tb * th * 4 + tb * th         # bits (dbl-buf) + mask
        return w + io + tmp

    # Pick hidden tile TH (prefer fully-resident weights, otherwise tile H so
    # the batch tile stays large) and a power-of-two batch tile TB.
    th_candidates = [H_full] + [t for t in (4096, 2048, 1024, 512, 256, 128)
                                if t < H_full]
    TH, TB, H_pad, n_htiles = H_full, sub, H_full, 1
    for th in th_candidates:
        h_pad = _round_up(hidden, th)
        nh = h_pad // th
        tb = tb_start
        while tb > sub and step_bytes(tb, th, nh) > gate:
            tb //= 2
        TH, TB, H_pad, n_htiles = th, tb, h_pad, nh
        if step_bytes(tb, th, nh) <= gate and tb >= tb_floor:
            break

    B_pad = _round_up(B, TB)
    # Give the v7x megacore ("parallel" batch axis) at least two steps.
    if B_pad // TB == 1 and TB > sub:
        TB //= 2
        B_pad = _round_up(B, TB)
    grid = (B_pad // TB, n_htiles)

    # --- wrapper-side zero padding ---
    xp = jnp.pad(x, ((0, B_pad - B), (0, K - in_dim)))
    w1p = jnp.pad(w1, ((0, K - in_dim), (0, H_pad - hidden)))
    w2p = jnp.pad(w2, ((0, H_pad - hidden), (0, N - out_dim)))
    b1p = jnp.pad(b1.astype(jnp.float32), (0, H_pad - hidden)).reshape(1, H_pad)
    b2p = jnp.pad(b2.astype(jnp.float32), (0, N - out_dim)).reshape(1, N)

    p = float(dropout_p)
    dropout_thresh = min(int(round(p * 2.0 ** 32)), 2 ** 32 - 1) if training else 0
    inv_keep = 1.0 / (1.0 - p) if p < 1.0 else 0.0

    # --- BlockSpecs ---
    def wspec(shape, idx):
        if n_htiles == 1:   # constant block index -> single buffer is enough
            return pl.BlockSpec(shape, idx, pipeline_mode=pl.Buffered(1))
        return pl.BlockSpec(shape, idx)

    in_specs = [
        pl.BlockSpec((TB, K), lambda i, j: (i, 0)),      # x tile streams over i
        wspec((K, TH), lambda i, j: (0, j)),             # W1
        wspec((1, TH), lambda i, j: (0, j)),             # b1
        wspec((TH, N), lambda i, j: (j, 0)),             # W2
        wspec((1, N), lambda i, j: (0, 0)),              # b2
    ]
    operands = [xp, w1p, b1p, w2p, b2p]
    if training:
        bits = jax.random.bits(jax.random.PRNGKey(seed), (B_pad, H_pad),
                               dtype=jnp.uint32)
        in_specs.append(pl.BlockSpec((TB, TH), lambda i, j: (i, j)))
        operands.append(bits)

    sb = step_bytes(TB, TH, n_htiles)
    vmem_limit = int(min(max(sb * 3 // 2, 32 << 20), int(vmem_cap * 0.625)))

    weight_bytes = (w1p.size + w2p.size) * itemsize + (b1p.size + b2p.size) * 4
    n_weight_passes = 1 if n_htiles == 1 else (B_pad // TB)
    bytes_accessed = (xp.size * itemsize + B_pad * N * itemsize
                      + weight_bytes * n_weight_passes)
    if training:
        bytes_accessed += B_pad * H_pad * 4
    cost = pl.CostEstimate(flops=2 * B_pad * (K * H_pad + H_pad * N),
                           transcendentals=0,
                           bytes_accessed=int(bytes_accessed))

    kernel = functools.partial(_mlp_kernel,
                               dropout_thresh=dropout_thresh,
                               inv_keep=inv_keep,
                               training=training)

    out = pl.pallas_call(
        kernel,
        out_shape=jax.ShapeDtypeStruct((B_pad, N), dt),
        grid=grid,
        in_specs=in_specs,
        out_specs=pl.BlockSpec((TB, N), lambda i, j: (i, 0)),
        scratch_shapes=[pltpu.VMEM((TB, N), jnp.float32)],
        compiler_params=pltpu.CompilerParams(
            dimension_semantics=("parallel", "arbitrary"),
            vmem_limit_bytes=vmem_limit),
        cost_estimate=cost,
    )(*operands)

    # Strip batch / output padding.
    return out[:B, :out_dim]


if __name__ == "__main__":
    # Small shapes consistent with the module: MLP(in_dim=16, hidden_dim=32, out_dim=8)
    B, in_dim, hidden_dim, out_dim = 8, 16, 32, 8

    key = jax.random.PRNGKey(0)
    kx, kw1, kb1, kw2, kb2 = jax.random.split(key, 5)

    x = jax.random.normal(kx, (B, in_dim), dtype=jnp.float32)
    # Deterministic param init (PyTorch-Linear-style uniform fan-in scaling).
    lim1 = 1.0 / (in_dim ** 0.5)
    lim2 = 1.0 / (hidden_dim ** 0.5)
    w1 = jax.random.uniform(kw1, (in_dim, hidden_dim), jnp.float32, -lim1, lim1)
    b1 = jax.random.uniform(kb1, (hidden_dim,), jnp.float32, -lim1, lim1)
    w2 = jax.random.uniform(kw2, (hidden_dim, out_dim), jnp.float32, -lim2, lim2)
    b2 = jax.random.uniform(kb2, (out_dim,), jnp.float32, -lim2, lim2)

    # Eval-mode forward (dropout = identity), matching module.eval() semantics.
    out = mlp_forward(x, w1, b1, w2, b2, dropout_p=0.2, training=False)
    out = jax.block_until_ready(out)

    # Pure-JAX reference check.
    ref = jnp.maximum(x @ w1 + b1, 0.0) @ w2 + b2
    assert out.shape == (B, out_dim)
    assert jnp.allclose(out, ref, atol=1e-5, rtol=1e-5)

    # Training-mode smoke test (dropout active): runs everywhere (no TPU-only
    # PRNG primitive), check shape and finiteness.
    out_tr = jax.block_until_ready(
        mlp_forward(x, w1, b1, w2, b2, dropout_p=0.2, training=True, seed=123))
    assert out_tr.shape == (B, out_dim)
    assert bool(jnp.all(jnp.isfinite(out_tr)))

    print("KERNEL_OK")
</pallas_src>

<mosaic_0001>
module attributes {stable_mosaic.version = 11 : i64} {
  func.func @_mlp_kernel(%arg0: i32, %arg1: i32, %arg2: memref<8x128xf32, #tpu.memory_space<vmem>>, %arg3: memref<128x128xf32, #tpu.memory_space<vmem>>, %arg4: memref<1x128xf32, #tpu.memory_space<vmem>>, %arg5: memref<128x128xf32, #tpu.memory_space<vmem>>, %arg6: memref<1x128xf32, #tpu.memory_space<vmem>>, %arg7: memref<8x128xf32, #tpu.memory_space<vmem>>, %arg8: memref<8x128xf32, #tpu.memory_space<vmem>>) attributes {dimension_semantics = [#tpu.dimension_semantics<parallel>, #tpu.dimension_semantics<arbitrary>], iteration_bounds = array<i64: 1, 1>, scalar_prefetch = 0 : i64, scratch_operands = 1 : i64, tpu.core_type = #tpu.core_type<tc>, window_params = [{transform_indices = @transform_0, window_bounds = array<i64: 8, 128>}, {pipeline_mode = #tpu.pipeline_mode<synchronous>, transform_indices = @transform_1, window_bounds = array<i64: 128, 128>}, {pipeline_mode = #tpu.pipeline_mode<synchronous>, transform_indices = @transform_2, window_bounds = array<i64: 1, 128>}, {pipeline_mode = #tpu.pipeline_mode<synchronous>, transform_indices = @transform_3, window_bounds = array<i64: 128, 128>}, {pipeline_mode = #tpu.pipeline_mode<synchronous>, transform_indices = @transform_4, window_bounds = array<i64: 1, 128>}, {transform_indices = @transform_5, window_bounds = array<i64: 8, 128>}]} {
    %c0_i32 = arith.constant 0 : i32
    %0 = arith.cmpi eq, %arg1, %c0_i32 : i32
    %1 = arith.extui %0 : i1 to i32
    %c0_i32_0 = arith.constant 0 : i32
    %2 = arith.cmpi ne, %1, %c0_i32_0 : i32
    scf.if %2 {
      %c0_16 = arith.constant 0 : index
      %c0_17 = arith.constant 0 : index
      %19 = vector.load %arg6[%c0_16, %c0_17] : memref<1x128xf32, #tpu.memory_space<vmem>>, vector<1x128xf32>
      %20 = vector.shape_cast %19 : vector<1x128xf32> to vector<1x128xf32>
      %21 = vector.broadcast %20 : vector<1x128xf32> to vector<8x128xf32>
      %c0_18 = arith.constant 0 : index
      %c0_19 = arith.constant 0 : index
      %22 = vector.load %arg8[%c0_18, %c0_19] : memref<8x128xf32, #tpu.memory_space<vmem>>, vector<8x128xf32>
      tpu.vector_store %arg8[%c0_18, %c0_19], %21 {strides = array<i32>} : memref<8x128xf32, #tpu.memory_space<vmem>>, vector<8x128xf32>,
    } else {
    }
    %c0 = arith.constant 0 : index
    %c0_1 = arith.constant 0 : index
    %3 = vector.load %arg2[%c0, %c0_1] : memref<8x128xf32, #tpu.memory_space<vmem>>, vector<8x128xf32>
    %c0_2 = arith.constant 0 : index
    %c0_3 = arith.constant 0 : index
    %4 = vector.load %arg3[%c0_2, %c0_3] : memref<128x128xf32, #tpu.memory_space<vmem>>, vector<128x128xf32>
    %cst = arith.constant dense<0.000000e+00> : vector<8x128xf32>
    %5 = tpu.matmul %3, %4, %cst {dimension_numbers = #tpu.dot_dimension_numbers<[1], [0], [0], [1], [0, 0, 1, 1], [], []>} : vector<8x128xf32>, vector<128x128xf32>, vector<8x128xf32> -> vector<8x128xf32>
    %c0_4 = arith.constant 0 : index
    %c0_5 = arith.constant 0 : index
    %6 = vector.load %arg4[%c0_4, %c0_5] : memref<1x128xf32, #tpu.memory_space<vmem>>, vector<1x128xf32>
    %7 = vector.broadcast %6 : vector<1x128xf32> to vector<8x128xf32>
    %8 = arith.addf %5, %7 : vector<8x128xf32>
    %cst_6 = arith.constant 0.000000e+00 : f32
    %9 = vector.broadcast %cst_6 : f32 to vector<8x128xf32>
    %10 = arith.maximumf %8, %9 : vector<8x128xf32>
    %c0_7 = arith.constant 0 : index
    %c0_8 = arith.constant 0 : index
    %11 = vector.load %arg8[%c0_7, %c0_8] : memref<8x128xf32, #tpu.memory_space<vmem>>, vector<8x128xf32>
    %c0_9 = arith.constant 0 : index
    %c0_10 = arith.constant 0 : index
    %12 = vector.load %arg5[%c0_9, %c0_10] : memref<128x128xf32, #tpu.memory_space<vmem>>, vector<128x128xf32>
    %cst_11 = arith.constant dense<0.000000e+00> : vector<8x128xf32>
    %13 = tpu.matmul %10, %12, %cst_11 {dimension_numbers = #tpu.dot_dimension_numbers<[1], [0], [0], [1], [0, 0, 1, 1], [], []>} : vector<8x128xf32>, vector<128x128xf32>, vector<8x128xf32> -> vector<8x128xf32>
    %14 = arith.addf %11, %13 : vector<8x128xf32>
    %c0_12 = arith.constant 0 : index
    %c0_13 = arith.constant 0 : index
    %15 = vector.load %arg8[%c0_12, %c0_13] : memref<8x128xf32, #tpu.memory_space<vmem>>, vector<8x128xf32>
    tpu.vector_store %arg8[%c0_12, %c0_13], %14 {strides = array<i32>} : memref<8x128xf32, #tpu.memory_space<vmem>>, vector<8x128xf32>,
    %c0_i32_14 = arith.constant 0 : i32
    %16 = arith.cmpi eq, %arg1, %c0_i32_14 : i32
    %17 = arith.extui %16 : i1 to i32
    %c0_i32_15 = arith.constant 0 : i32
    %18 = arith.cmpi ne, %17, %c0_i32_15 : i32
    scf.if %18 {
      %c0_16 = arith.constant 0 : index
      %c0_17 = arith.constant 0 : index
      %19 = vector.load %arg8[%c0_16, %c0_17] : memref<8x128xf32, #tpu.memory_space<vmem>>, vector<8x128xf32>
      %c0_18 = arith.constant 0 : index
      %c0_19 = arith.constant 0 : index
      %20 = vector.load %arg7[%c0_18, %c0_19] : memref<8x128xf32, #tpu.memory_space<vmem>>, vector<8x128xf32>
      tpu.vector_store %arg7[%c0_18, %c0_19], %19 {strides = array<i32>} : memref<8x128xf32, #tpu.memory_space<vmem>>, vector<8x128xf32>,
    } else {
    }
    return
  }
  func.func @transform_0(%arg0: i32, %arg1: i32) -> (i32, i32) {
    %c0_i32 = arith.constant 0 : i32
    %c0_i32_0 = arith.constant 0 : i32
    return %arg0, %c0_i32 : i32, i32
  }
  func.func @transform_1(%arg0: i32, %arg1: i32) -> (i32, i32) {
    %c0_i32 = arith.constant 0 : i32
    %c0_i32_0 = arith.constant 0 : i32
    return %c0_i32, %arg1 : i32, i32
  }
  func.func @transform_2(%arg0: i32, %arg1: i32) -> (i32, i32) {
    %c0_i32 = arith.constant 0 : i32
    %c0_i32_0 = arith.constant 0 : i32
    return %c0_i32, %arg1 : i32, i32
  }
  func.func @transform_3(%arg0: i32, %arg1: i32) -> (i32, i32) {
    %c0_i32 = arith.constant 0 : i32
    %c0_i32_0 = arith.constant 0 : i32
    return %arg1, %c0_i32 : i32, i32
  }
  func.func @transform_4(%arg0: i32, %arg1: i32) -> (i32, i32) {
    %c0_i32 = arith.constant 0 : i32
    %c0_i32_0 = arith.constant 0 : i32
    %c0_i32_1 = arith.constant 0 : i32
    return %c0_i32, %c0_i32_0 : i32, i32
  }
  func.func @transform_5(%arg0: i32, %arg1: i32) -> (i32, i32) {
    %c0_i32 = arith.constant 0 : i32
    %c0_i32_0 = arith.constant 0 : i32
    return %arg0, %c0_i32 : i32, i32
  }
}

</mosaic_0001>

<llo_original>
// kernel: tpu_custom_call.1
$region0: #{tpu_custom_call.1}
  #allocation0 [shape = 'u32[]', space=smem, size = 0x4, offset = 0x4, fixed_abs, tag = 'smem constant byte address 0x4 - core index']
  #allocation1 [shape = 'u32[72,128]{1,0:T(1,128)}', space=vmem, size = 0x9000, scoped, tag = 'internal scratch']
  #allocation2 [shape = 'f32[8,128]{1,0:T(8,128)}', space=vmem, size = 0x1000, scoped, tag = 'scratch operand']
  %s0 = inlined_call_operand.hbm [shape: f32[8,128], index: 0, kind: input, shape index: {}]
  %s1 = inlined_call_operand.hbm [shape: f32[128,128], index: 1, kind: input, shape index: {}]
  %s2 = inlined_call_operand.vmem [shape: f32[1,128], index: 2, kind: input, shape index: {}]
  %s3 = inlined_call_operand.hbm [shape: f32[128,128], index: 3, kind: input, shape index: {}]
  %s4 = inlined_call_operand.vmem [shape: f32[1,128], index: 4, kind: input, shape index: {}]
  %s5 = inlined_call_operand.hbm [shape: f32[8,128], index: 5, kind: output, shape index: {}]
  %s6 = sld [smem:[#allocation0]]
  $region50: #{tpu_custom_call.1} parent=0
    _
  %s8 = ssub.s32 1, %s6
  %s9 = scalar_select 0, %s8, %s6
  $region1: #{tpu_custom_call.1} parent=0
    #allocation3 [shape = 'u8[4096]{0}', space=vmem, size = 0x1000, scoped, tag = 'input window, operand 0, single buffered']
    #allocation4 [shape = 's32[1]{0}', space=sflag, size = 0x4, scoped, tag = 'scoped memory for tpu_custom_call.1']
    #allocation5 [shape = 's32[1]{0}', space=sflag, size = 0x4, scoped, tag = 'scoped memory for tpu_custom_call.1']
    #allocation6 [shape = 'u8[65536]{0}', space=vmem, size = 0x10000, scoped, tag = 'input window, operand 1, single buffered']
    #allocation7 [shape = 's32[1]{0}', space=sflag, size = 0x4, scoped, tag = 'scoped memory for tpu_custom_call.1']
    #allocation8 [shape = 'u8[65536]{0}', space=vmem, size = 0x10000, scoped, tag = 'input window, operand 3, single buffered']
    #allocation9 [shape = 'u8[4096]{0}', space=vmem, size = 0x1000, scoped, tag = 'output window, operand 0, single buffered']
    %10 = vsyncpa [#allocation4], 0
    %11 = vsyncpa [#allocation7], 0
    %12 = vsyncpa [#allocation5], 0
    // Predicated region
    $region2: #{tpu_custom_call.1} parent=1 // pred_check
      _
    $region3: #{tpu_custom_call.1} parent=1 // pred_check_branch
      %14 = sbr.rel (0) target = $region5
    $region4: #{tpu_custom_call.1} parent=1 // pred_region
      %16 = vsyncadd [#allocation4], 0
      %s18 = sshll.u32 %s0, 4
      %s19 = int_to_ptr.hbm [resolvable:$true] %s18
      %s20 = sshll.u32 [#allocation3], 4
      %s21 = int_to_ptr.vmem [resolvable:$true] %s20
      %23 = dma.hbm_to_vmem [thread:$0]  %s19, 128, %s21, [#allocation4]
    $region5: #{tpu_custom_call.1} parent=1 // pred_fallthru
      _
    // Predicated region
    $region6: #{tpu_custom_call.1} parent=1 // pred_check
      _
    $region7: #{tpu_custom_call.1} parent=1 // pred_check_branch
      %25 = sbr.rel (0) target = $region9
    $region8: #{tpu_custom_call.1} parent=1 // pred_region
      %27 = vsyncadd [#allocation7], 0
      %s28 = sshll.u32 %s1, 4
      %s29 = int_to_ptr.hbm [resolvable:$true] %s28
      %s30 = sshll.u32 [#allocation6], 4
      %s31 = int_to_ptr.vmem [resolvable:$true] %s30
      %36 = dma.hbm_to_vmem [thread:$0]  %s29, 2048, %s31, [#allocation7], 128, 128, 8
    $region9: #{tpu_custom_call.1} parent=1 // pred_fallthru
      _
    // Predicated region
    $region10: #{tpu_custom_call.1} parent=1 // pred_check
      _
    $region11: #{tpu_custom_call.1} parent=1 // pred_check_branch
      %38 = sbr.rel (0) target = $region13
    $region12: #{tpu_custom_call.1} parent=1 // pred_region
      _
    $region13: #{tpu_custom_call.1} parent=1 // pred_fallthru
      _
    // Predicated region
    $region14: #{tpu_custom_call.1} parent=1 // pred_check
      _
    $region15: #{tpu_custom_call.1} parent=1 // pred_check_branch
      %40 = sbr.rel (0) target = $region17
    $region16: #{tpu_custom_call.1} parent=1 // pred_region
      %42 = vsyncadd [#allocation7], 0
      %s43 = sshll.u32 %s3, 4
      %s44 = int_to_ptr.hbm [resolvable:$true] %s43
      %s45 = sshll.u32 [#allocation8], 4
      %s46 = int_to_ptr.vmem [resolvable:$true] %s45
      %51 = dma.hbm_to_vmem [thread:$0]  %s44, 2048, %s46, [#allocation7], 128, 128, 8
    $region17: #{tpu_custom_call.1} parent=1 // pred_fallthru
      _
    // Predicated region
    $region18: #{tpu_custom_call.1} parent=1 // pred_check
      _
    $region19: #{tpu_custom_call.1} parent=1 // pred_check_branch
      %53 = sbr.rel (0) target = $region21
    $region20: #{tpu_custom_call.1} parent=1 // pred_region
      _
    $region21: #{tpu_custom_call.1} parent=1 // pred_fallthru
      _
    // Predicated region
    $region22: #{tpu_custom_call.1} parent=1 // pred_check
      _
    $region23: #{tpu_custom_call.1} parent=1 // pred_check_branch
      %55 = sbr.rel (0) target = $region25
    $region24: #{tpu_custom_call.1} parent=1 // pred_region
      %57 = dma.done [#allocation4], 128
    $region25: #{tpu_custom_call.1} parent=1 // pred_fallthru
      _
    // Predicated region
    $region26: #{tpu_custom_call.1} parent=1 // pred_check
      _
    $region27: #{tpu_custom_call.1} parent=1 // pred_check_branch
      %59 = sbr.rel (0) target = $region29
    $region28: #{tpu_custom_call.1} parent=1 // pred_region
      %61 = dma.done [#allocation7], 2048
    $region29: #{tpu_custom_call.1} parent=1 // pred_fallthru
      _
    // Predicated region
    $region30: #{tpu_custom_call.1} parent=1 // pred_check
      _
    $region31: #{tpu_custom_call.1} parent=1 // pred_check_branch
      %63 = sbr.rel (0) target = $region33
    $region32: #{tpu_custom_call.1} parent=1 // pred_region
      %65 = dma.done [#allocation7], 2048
    $region33: #{tpu_custom_call.1} parent=1 // pred_fallthru
      _
    %p66 = scmp.eq.s32.totalorder 0, 0
    // Predicated region
    $region34: #{tpu_custom_call.1} parent=1 // pred_check
      %p67 = pneg %p66
    $region35: #{tpu_custom_call.1} parent=1 // pred_check_branch
      %69 = sbr.rel (%p67) target = $region37
    $region36: #{tpu_custom_call.1} parent=1 // pred_region
      %v70 = vld [vmem:[%s4] sm:$0x1]
      %v72 = vperm.slane %v70, 0
      %74 = vst [vmem:[#allocation2] sm:$0xff] %v72
    $region37: #{tpu_custom_call.1} parent=1 // pred_fallthru
      _
    %v75 = vld [vmem:[#allocation3] sm:$0xff]
    %v76 = vld [vmem:[#allocation6] sm:$0xff]
    %v77 = vld [vmem:[#allocation6 + $0x8] sm:$0xff]
    %v78 = vld [vmem:[#allocation6 + $0x10] sm:$0xff]
    %v79 = vld [vmem:[#allocation6 + $0x18] sm:$0xff]
    %v80 = vld [vmem:[#allocation6 + $0x20] sm:$0xff]
    %v81 = vld [vmem:[#allocation6 + $0x28] sm:$0xff]
    %v82 = vld [vmem:[#allocation6 + $0x30] sm:$0xff]
    %v83 = vld [vmem:[#allocation6 + $0x38] sm:$0xff]
    %v84 = vld [vmem:[#allocation6 + $0x40] sm:$0xff]
    %v85 = vld [vmem:[#allocation6 + $0x48] sm:$0xff]
    %v86 = vld [vmem:[#allocation6 + $0x50] sm:$0xff]
    %v87 = vld [vmem:[#allocation6 + $0x58] sm:$0xff]
    %v88 = vld [vmem:[#allocation6 + $0x60] sm:$0xff]
    %v89 = vld [vmem:[#allocation6 + $0x68] sm:$0xff]
    %v90 = vld [vmem:[#allocation6 + $0x70] sm:$0xff]
    %v91 = vld [vmem:[#allocation6 + $0x78] sm:$0xff]
    %v92 = vld [vmem:[%s2] sm:$0x1]
    %v94 = vperm.slane %v92, 0
    %96 = vmatpush.msra.mxu0 %v91
    %97 = vmatpush.msra.mxu0 %v90
    %98 = vmatpush.msra.mxu0 %v89
    %99 = vmatpush.msra.mxu0 %v88
    %100 = vmatpush.msra.mxu0 %v87
    %101 = vmatpush.msra.mxu0 %v86
    %102 = vmatpush.msra.mxu0 %v85
    %103 = vmatpush.msra.mxu0 %v84
    %104 = vmatpush.msra.mxu0 %v83
    %105 = vmatpush.msra.mxu0 %v82
    %106 = vmatpush.msra.mxu0 %v81
    %107 = vmatpush.msra.mxu0 %v80
    %108 = vmatpush.msra.mxu0 %v79
    %109 = vmatpush.msra.mxu0 %v78
    %110 = vmatpush.msra.mxu0 %v77
    %111 = vmatpush.msra.mxu0 %v76
    %112 = vmatmul.f32.gmra.mxu0 %v75
    %v113 = vpop.f32.mrf.mxu0
    %v114 = vadd.f32 %v94, %v113
    %115 = vdwg.mxu0
    %v116 = vmax.f32 %v114, 0.0
    %v117 = vld [vmem:[#allocation2] sm:$0xff]
    %v118 = vld [vmem:[#allocation8] sm:$0xff]
    %v119 = vld [vmem:[#allocation8 + $0x8] sm:$0xff]
    %v120 = vld [vmem:[#allocation8 + $0x10] sm:$0xff]
    %v121 = vld [vmem:[#allocation8 + $0x18] sm:$0xff]
    %v122 = vld [vmem:[#allocation8 + $0x20] sm:$0xff]
    %v123 = vld [vmem:[#allocation8 + $0x28] sm:$0xff]
    %v124 = vld [vmem:[#allocation8 + $0x30] sm:$0xff]
    %v125 = vld [vmem:[#allocation8 + $0x38] sm:$0xff]
    %v126 = vld [vmem:[#allocation8 + $0x40] sm:$0xff]
    %v127 = vld [vmem:[#allocation8 + $0x48] sm:$0xff]
    %v128 = vld [vmem:[#allocation8 + $0x50] sm:$0xff]
    %v129 = vld [vmem:[#allocation8 + $0x58] sm:$0xff]
    %v130 = vld [vmem:[#allocation8 + $0x60] sm:$0xff]
    %v131 = vld [vmem:[#allocation8 + $0x68] sm:$0xff]
    %v132 = vld [vmem:[#allocation8 + $0x70] sm:$0xff]
    %v133 = vld [vmem:[#allocation8 + $0x78] sm:$0xff]
    %134 = vmatpush.msra.mxu0 %v133
    %135 = vmatpush.msra.mxu0 %v132
    %136 = vmatpush.msra.mxu0 %v131
    %137 = vmatpush.msra.mxu0 %v130
    %138 = vmatpush.msra.mxu0 %v129
    %139 = vmatpush.msra.mxu0 %v128
    %140 = vmatpush.msra.mxu0 %v127
    %141 = vmatpush.msra.mxu0 %v126
    %142 = vmatpush.msra.mxu0 %v125
    %143 = vmatpush.msra.mxu0 %v124
    %144 = vmatpush.msra.mxu0 %v123
    %145 = vmatpush.msra.mxu0 %v122
    %146 = vmatpush.msra.mxu0 %v121
    %147 = vmatpush.msra.mxu0 %v120
    %148 = vmatpush.msra.mxu0 %v119
    %149 = vmatpush.msra.mxu0 %v118
    %150 = vmatmul.f32.gmra.mxu0 %v116
    %v151 = vpop.f32.mrf.mxu0
    %v152 = vadd.f32 0.0, %v151
    %153 = vdwg.mxu0
    %v154 = vadd.f32 %v117, %v152
    %155 = vst [vmem:[#allocation2] sm:$0xff] %v154
    // Predicated region
    $region38: #{tpu_custom_call.1} parent=1 // pred_check
      %p156 = pneg %p66
    $region39: #{tpu_custom_call.1} parent=1 // pred_check_branch
      %158 = sbr.rel (%p156) target = $region41
    $region40: #{tpu_custom_call.1} parent=1 // pred_region
      %v159 = vld [vmem:[#allocation2] sm:$0xff]
      %160 = vst [vmem:[#allocation9] sm:$0xff] %v159
    $region41: #{tpu_custom_call.1} parent=1 // pred_fallthru
      _
    // Predicated region
    $region42: #{tpu_custom_call.1} parent=1 // pred_check
      _
    $region43: #{tpu_custom_call.1} parent=1 // pred_check_branch
      %162 = sbr.rel (0) target = $region45
    $region44: #{tpu_custom_call.1} parent=1 // pred_region
      %164 = vsyncadd [#allocation5], 0
      %s166 = sshll.u32 [#allocation9], 4
      %s167 = int_to_ptr.vmem [resolvable:$true] %s166
      %s168 = sshll.u32 %s5, 4
      %s169 = int_to_ptr.hbm [resolvable:$true] %s168
      %171 = dma.vmem_to_hbm [thread:$0]  %s167, 128, %s169, [#allocation5]
    $region45: #{tpu_custom_call.1} parent=1 // pred_fallthru
      _
    // Predicated region
    $region46: #{tpu_custom_call.1} parent=1 // pred_check
      _
    $region47: #{tpu_custom_call.1} parent=1 // pred_check_branch
      %173 = sbr.rel (0) target = $region49
    $region48: #{tpu_custom_call.1} parent=1 // pred_region
      %175 = dma.done [#allocation5], 128
    $region49: #{tpu_custom_call.1} parent=1 // pred_fallthru
      _
    %176 = vsyncpa [#allocation4], 1
    %177 = vsyncpa [#allocation7], 1
    %178 = vsyncpa [#allocation5], 1

</llo_original>
